<compile_context>
chip_gen: v5e
topology: v5e:2x2
jax: 0.10.0
libtpu: 0.0.40
codegen_flags: <defaults>
</compile_context>

<pallas_src>
import math

import jax
import jax.numpy as jnp
from jax.experimental import pallas as pl
from jax.experimental.pallas import tpu as pltpu


_MIB = 1 << 20
_ROW_ALIGN = 16      # bf16 packs 16 rows per vreg sublane group
_LANE_ALIGN = 128    # lane width


# ------------------------------ Pallas kernel -------------------------------

def _ffn_kernel(x_ref, w13_ref, w2_ref, o_ref, acc_ref):
    """Fused SwiGLU MLP over one (tm, D) row tile and one (th,) hidden tile."""
    j = pl.program_id(1)

    @pl.when(j == 0)
    def _init():
        acc_ref[...] = jnp.zeros_like(acc_ref)

    x = x_ref[...]                                                      # (tm, D) bf16
    # MXU matmuls: bf16 operands, f32 accumulation. w13_ref block is (2, D, th):
    # one DMA stream carries both the gate (w1) and up (w3) weight tiles.
    h1 = jnp.dot(x, w13_ref[0], preferred_element_type=jnp.float32)     # (tm, th) f32
    h3 = jnp.dot(x, w13_ref[1], preferred_element_type=jnp.float32)     # (tm, th) f32

    # SiLU in f32: single EUP logistic + VPU multiplies.
    g = (h1 * jax.nn.sigmoid(h1)) * h3                                  # (tm, th) f32

    # Partial w2 contraction over this hidden tile; accumulate in f32 scratch.
    acc_ref[...] += jnp.dot(g.astype(w2_ref.dtype), w2_ref[...],
                            preferred_element_type=jnp.float32)         # (tm, D)

    @pl.when(j == pl.num_programs(1) - 1)
    def _finalize():
        o_ref[...] = acc_ref[...].astype(o_ref.dtype)


# --------------------------- tile / VMEM selection ---------------------------

def _round_up(x, m):
    return ((x + m - 1) // m) * m


def _tpu_generation():
    """Best-effort (vmem_capacity_bytes, is_v7_like, is_v6_like, is_v5_like)."""
    kind = ""
    try:
        kind = jax.devices()[0].device_kind.lower()
    except Exception:
        pass
    vmem_cap = None
    try:
        vmem_cap = int(pltpu.get_tpu_info().vmem_capacity_bytes)
    except Exception:
        vmem_cap = None

    is_v7 = ("v7" in kind) or ("7x" in kind)
    is_v6 = "v6" in kind
    is_v5 = "v5" in kind
    if vmem_cap is None:
        # Conservative fallback: assume the small-VMEM part unless we know better.
        vmem_cap = 128 * _MIB if (is_v5 or is_v6) else 64 * _MIB
    if vmem_cap <= 80 * _MIB:
        is_v7 = True  # 64 MiB/TC, dual-TensorCore style budgeting
    return vmem_cap, is_v7, is_v6, is_v5


def _aligned_divisors(total, align):
    divs = [d for d in range(align, total + 1, align) if total % d == 0]
    return divs if divs else [total]


def _select_tiles(M, D, Dh, w_bytes, tm_req=None, th_req=None):
    """Pick (tm, th, vmem_limit_bytes) for the current TPU generation."""
    vmem_cap, is_v7, is_v6, is_v5 = _tpu_generation()
    budget = int(0.85 * vmem_cap)

    # Generation-aware preferences (tm controls arithmetic intensity).
    if is_v7:
        tm_pref, th_pref = 512, 384       # 64 MiB part: shrink th, not tm
    elif is_v6:
        tm_pref, th_pref = 640, 1024      # ~918 TF/s vs ~1.4 TB/s -> tm >~ 640
    elif is_v5:
        tm_pref, th_pref = 384, 1024      # 197 TF/s vs ~0.8 TB/s; spend VMEM on th
    else:
        tm_pref, th_pref = 512, 512
    if tm_req is not None:
        tm_pref = tm_req
    if th_req is not None:
        th_pref = th_req

    # Row tile: pad-friendly, and keep >=2 row tiles on dual-TensorCore parts so
    # the "parallel" grid axis actually shards across both cores.
    m_pad_full = _round_up(M, _ROW_ALIGN)
    tm = min(_round_up(max(tm_pref, _ROW_ALIGN), _ROW_ALIGN), m_pad_full)
    if is_v7 and m_pad_full >= 2 * _ROW_ALIGN:
        tm = min(tm, _round_up(-(-m_pad_full // 2), _ROW_ALIGN))
    tm = max(_ROW_ALIGN, tm)

    # Hidden tile: aligned divisor of Dh (Llama hidden dims are 128-multiples).
    th_opts = _aligned_divisors(Dh, _LANE_ALIGN)          # ascending
    th_candidates = [d for d in th_opts if d <= th_pref]
    th = max(th_candidates) if th_candidates else th_opts[0]

    def est(tm_, th_):
        # Double-buffered I/O tiles (x, [w1;w3], w2, out) + f32 accumulator
        # + f32 intermediates (h1, h3, g) + compiler-internal scratch headroom.
        io = (tm_ * D + 2 * D * th_ + th_ * D + tm_ * D) * w_bytes
        acc = tm_ * D * 4
        inter = 3 * tm_ * th_ * 4
        return 2 * io + acc + inter + 2 * _MIB

    # Clamp to the VMEM budget: shrink th first (preserves arithmetic intensity),
    # then tm.
    while est(tm, th) > budget:
        smaller_th = [d for d in th_opts if d < th]
        if smaller_th:
            th = max(smaller_th)
        elif tm > _ROW_ALIGN:
            tm = max(_ROW_ALIGN, _round_up(tm // 2, _ROW_ALIGN))
        else:
            break

    # Generation-aware scoped-VMEM limit: don't cap 128 MiB parts at a v7x-sized
    # budget; stay comfortably under the physical capacity everywhere.
    vmem_limit = int(min(0.9 * vmem_cap, 120 * _MIB))
    vmem_limit = max(vmem_limit, min(est(tm, th), int(0.9 * vmem_cap)))
    return tm, th, int(vmem_limit)


# ------------------------------ host wrappers --------------------------------

def prepare_ffn_weights(w1, w2, w3, dtype=jnp.bfloat16):
    """One-time weight prep (do this at model init, NOT per forward call):
    cast to the MXU dtype and stack gate/up so each grid step needs one weight
    DMA stream for w1+w3."""
    D, Dh = w1.shape
    assert w3.shape == (D, Dh) and w2.shape == (Dh, D)
    w13 = jnp.stack([w1.astype(dtype), w3.astype(dtype)], axis=0)   # (2, D, Dh)
    return w13, w2.astype(dtype)


def feed_forward(x, w13, w2, *, tm=None, th=None, out_dtype=jnp.bfloat16):
    """out = w2( silu(x @ w1) * (x @ w3) ).

    x: (..., D); w13: (2, D, Dh) prepared by prepare_ffn_weights; w2: (Dh, D).
    tm/th override the generation-aware tile selection (still VMEM-clamped).
    """
    orig_shape = x.shape
    D = orig_shape[-1]
    M = math.prod(orig_shape[:-1])
    assert w13.ndim == 3 and w13.shape[0] == 2 and w13.shape[1] == D
    Dh = w13.shape[2]
    assert w2.shape == (Dh, D)

    compute_dtype = w13.dtype
    x2d = x.reshape(M, D).astype(compute_dtype)   # activations only; weights are pre-cast

    w_bytes = jnp.dtype(compute_dtype).itemsize
    tm, th, vmem_limit = _select_tiles(M, D, Dh, w_bytes, tm_req=tm, th_req=th)

    # Pad rows up to a tile multiple instead of falling back to a whole-M tile.
    M_pad = _round_up(M, tm)
    if M_pad != M:
        x2d = jnp.pad(x2d, ((0, M_pad - M), (0, 0)))

    grid = (M_pad // tm, Dh // th)

    # TODO(synk): on v6e, consider pipeline_mode=pl.Buffered(3) on the weight
    # specs if xprof shows exposed DMA at row-tile boundaries (needs VMEM headroom).
    out2d = pl.pallas_call(
        _ffn_kernel,
        out_shape=jax.ShapeDtypeStruct((M_pad, D), out_dtype),
        grid_spec=pltpu.PrefetchScalarGridSpec(
            num_scalar_prefetch=0,
            grid=grid,
            in_specs=[
                pl.BlockSpec((tm, D), lambda i, j: (i, 0)),        # x rows
                pl.BlockSpec((2, D, th), lambda i, j: (0, 0, j)),  # [w1; w3] hidden tile
                pl.BlockSpec((th, D), lambda i, j: (j, 0)),        # w2 hidden tile
            ],
            out_specs=pl.BlockSpec((tm, D), lambda i, j: (i, 0)),
            scratch_shapes=[pltpu.VMEM((tm, D), jnp.float32)],
        ),
        compiler_params=pltpu.CompilerParams(
            dimension_semantics=("parallel", "arbitrary"),
            vmem_limit_bytes=vmem_limit,
        ),
    )(x2d, w13, w2)

    if M_pad != M:
        out2d = out2d[:M]
    return out2d.reshape(orig_shape)


# --------------------------------- reference ---------------------------------

def feed_forward_ref(x, w1, w2, w3, compute_dtype=jnp.bfloat16):
    """Plain-JAX reference with the same operand-dtype policy (f32 math)."""
    f32 = jnp.float32
    xb = x.astype(compute_dtype).astype(f32)
    w1b = w1.astype(compute_dtype).astype(f32)
    w2b = w2.astype(compute_dtype).astype(f32)
    w3b = w3.astype(compute_dtype).astype(f32)
    h1 = xb @ w1b
    h3 = xb @ w3b
    g = h1 * jax.nn.sigmoid(h1) * h3
    return g @ w2b


# ----------------------------------- main ------------------------------------

if __name__ == "__main__":
    # Small shapes consistent with the module's hidden_dim computation.
    B, S, D = 2, 16, 256
    multiple_of = 128
    ffn_dim_multiplier = None

    hidden_dim = 4 * D
    hidden_dim = int(2 * hidden_dim / 3)
    if ffn_dim_multiplier is not None:
        hidden_dim = int(ffn_dim_multiplier * hidden_dim)
    hidden_dim = multiple_of * ((hidden_dim + multiple_of - 1) // multiple_of)  # 768

    key = jax.random.PRNGKey(0)
    kx, k1, k2, k3 = jax.random.split(key, 4)
    s = 0.02
    x = jax.random.normal(kx, (B, S, D), jnp.float32)
    w1 = jax.random.normal(k1, (D, hidden_dim), jnp.float32) * s
    w2 = jax.random.normal(k2, (hidden_dim, D), jnp.float32) * s
    w3 = jax.random.normal(k3, (D, hidden_dim), jnp.float32) * s

    # One-time weight prep (bf16 cast + gate/up stacking), NOT per forward call.
    w13, w2p = prepare_ffn_weights(w1, w2, w3)

    ref = feed_forward_ref(x, w1, w2, w3)

    # Small explicit tiles purely to exercise both grid axes (grid = (2, 3)).
    out = feed_forward(x, w13, w2p, tm=16, th=256)
    jax.block_until_ready(out)
    assert out.shape == (B, S, D) and out.dtype == jnp.bfloat16
    assert bool(jnp.all(jnp.isfinite(out)))
    err = float(jnp.max(jnp.abs(out.astype(jnp.float32) - ref)))
    assert err < 2e-2, f"max abs error too large: {err}"

    # Generation-aware auto tile selection path (exercises padding / clamping).
    out_auto = feed_forward(x, w13, w2p)
    jax.block_until_ready(out_auto)
    err_auto = float(jnp.max(jnp.abs(out_auto.astype(jnp.float32) - ref)))
    assert err_auto < 2e-2, f"max abs error (auto tiles) too large: {err_auto}"

    # TODO(synk): ColumnParallelLinear/RowParallelLinear tensor-parallel sharding
    # is a multi-device concern; this is a single-device kernel (no gather/scatter).

    print("KERNEL_OK")
</pallas_src>

<mosaic_0001>
module attributes {stable_mosaic.version = 11 : i64} {
  func.func @_ffn_kernel(%arg0: i32, %arg1: i32, %arg2: memref<16x256xbf16, #tpu.memory_space<vmem>>, %arg3: memref<2x256x256xbf16, #tpu.memory_space<vmem>>, %arg4: memref<256x256xbf16, #tpu.memory_space<vmem>>, %arg5: memref<16x256xbf16, #tpu.memory_space<vmem>>, %arg6: memref<16x256xf32, #tpu.memory_space<vmem>>) attributes {dimension_semantics = [#tpu.dimension_semantics<parallel>, #tpu.dimension_semantics<arbitrary>], iteration_bounds = array<i64: 2, 3>, scalar_prefetch = 0 : i64, scratch_operands = 1 : i64, tpu.core_type = #tpu.core_type<tc>, window_params = [{transform_indices = @transform_0, window_bounds = array<i64: 16, 256>}, {transform_indices = @transform_1, window_bounds = array<i64: 2, 256, 256>}, {transform_indices = @transform_2, window_bounds = array<i64: 256, 256>}, {transform_indices = @transform_3, window_bounds = array<i64: 16, 256>}]} {
    %c0_i32 = arith.constant 0 : i32
    %0 = arith.cmpi eq, %arg1, %c0_i32 : i32
    %1 = arith.extui %0 : i1 to i32
    %c0_i32_0 = arith.constant 0 : i32
    %2 = arith.cmpi ne, %1, %c0_i32_0 : i32
    scf.if %2 {
      %cst_17 = arith.constant 0.000000e+00 : f32
      %26 = vector.broadcast %cst_17 : f32 to vector<16x256xf32>
      %c0_18 = arith.constant 0 : index
      %c0_19 = arith.constant 0 : index
      %27 = vector.load %arg6[%c0_18, %c0_19] : memref<16x256xf32, #tpu.memory_space<vmem>>, vector<16x256xf32>
      tpu.vector_store %arg6[%c0_18, %c0_19], %26 {strides = array<i32>} : memref<16x256xf32, #tpu.memory_space<vmem>>, vector<16x256xf32>,
    } else {
    }
    %c0 = arith.constant 0 : index
    %c0_1 = arith.constant 0 : index
    %3 = vector.load %arg2[%c0, %c0_1] : memref<16x256xbf16, #tpu.memory_space<vmem>>, vector<16x256xbf16>
    %c0_2 = arith.constant 0 : index
    %c0_3 = arith.constant 0 : index
    %c0_4 = arith.constant 0 : index
    %4 = vector.load %arg3[%c0_2, %c0_3, %c0_4] : memref<2x256x256xbf16, #tpu.memory_space<vmem>>, vector<1x256x256xbf16>
    %5 = vector.shape_cast %4 : vector<1x256x256xbf16> to vector<256x256xbf16>
    %cst = arith.constant dense<0.000000e+00> : vector<16x256xf32>
    %6 = tpu.matmul %3, %5, %cst {dimension_numbers = #tpu.dot_dimension_numbers<[1], [0], [0], [1], [0, 0, 1, 1], [], []>} : vector<16x256xbf16>, vector<256x256xbf16>, vector<16x256xf32> -> vector<16x256xf32>
    %c1 = arith.constant 1 : index
    %c0_5 = arith.constant 0 : index
    %c0_6 = arith.constant 0 : index
    %7 = vector.load %arg3[%c1, %c0_5, %c0_6] : memref<2x256x256xbf16, #tpu.memory_space<vmem>>, vector<1x256x256xbf16>
    %8 = vector.shape_cast %7 : vector<1x256x256xbf16> to vector<256x256xbf16>
    %cst_7 = arith.constant dense<0.000000e+00> : vector<16x256xf32>
    %9 = tpu.matmul %3, %8, %cst_7 {dimension_numbers = #tpu.dot_dimension_numbers<[1], [0], [0], [1], [0, 0, 1, 1], [], []>} : vector<16x256xbf16>, vector<256x256xbf16>, vector<16x256xf32> -> vector<16x256xf32>
    %10 = arith.negf %6 : vector<16x256xf32>
    %11 = math.exp %10 : vector<16x256xf32>
    %cst_8 = arith.constant 1.000000e+00 : f32
    %12 = vector.broadcast %cst_8 : f32 to vector<16x256xf32>
    %13 = arith.addf %12, %11 : vector<16x256xf32>
    %14 = arith.divf %12, %13 : vector<16x256xf32>
    %15 = arith.mulf %6, %14 : vector<16x256xf32>
    %16 = arith.mulf %15, %9 : vector<16x256xf32>
    %c0_9 = arith.constant 0 : index
    %c0_10 = arith.constant 0 : index
    %17 = vector.load %arg6[%c0_9, %c0_10] : memref<16x256xf32, #tpu.memory_space<vmem>>, vector<16x256xf32>
    %18 = arith.truncf %16 : vector<16x256xf32> to vector<16x256xbf16>
    %c0_11 = arith.constant 0 : index
    %c0_12 = arith.constant 0 : index
    %19 = vector.load %arg4[%c0_11, %c0_12] : memref<256x256xbf16, #tpu.memory_space<vmem>>, vector<256x256xbf16>
    %cst_13 = arith.constant dense<0.000000e+00> : vector<16x256xf32>
    %20 = tpu.matmul %18, %19, %cst_13 {dimension_numbers = #tpu.dot_dimension_numbers<[1], [0], [0], [1], [0, 0, 1, 1], [], []>} : vector<16x256xbf16>, vector<256x256xbf16>, vector<16x256xf32> -> vector<16x256xf32>
    %21 = arith.addf %17, %20 : vector<16x256xf32>
    %c0_14 = arith.constant 0 : index
    %c0_15 = arith.constant 0 : index
    %22 = vector.load %arg6[%c0_14, %c0_15] : memref<16x256xf32, #tpu.memory_space<vmem>>, vector<16x256xf32>
    tpu.vector_store %arg6[%c0_14, %c0_15], %21 {strides = array<i32>} : memref<16x256xf32, #tpu.memory_space<vmem>>, vector<16x256xf32>,
    %c2_i32 = arith.constant 2 : i32
    %23 = arith.cmpi eq, %arg1, %c2_i32 : i32
    %24 = arith.extui %23 : i1 to i32
    %c0_i32_16 = arith.constant 0 : i32
    %25 = arith.cmpi ne, %24, %c0_i32_16 : i32
    scf.if %25 {
      %c0_17 = arith.constant 0 : index
      %c0_18 = arith.constant 0 : index
      %26 = vector.load %arg6[%c0_17, %c0_18] : memref<16x256xf32, #tpu.memory_space<vmem>>, vector<16x256xf32>
      %27 = arith.truncf %26 : vector<16x256xf32> to vector<16x256xbf16>
      %c0_19 = arith.constant 0 : index
      %c0_20 = arith.constant 0 : index
      %28 = vector.load %arg5[%c0_19, %c0_20] : memref<16x256xbf16, #tpu.memory_space<vmem>>, vector<16x256xbf16>
      tpu.vector_store %arg5[%c0_19, %c0_20], %27 {strides = array<i32>} : memref<16x256xbf16, #tpu.memory_space<vmem>>, vector<16x256xbf16>,
    } else {
    }
    return
  }
  func.func @transform_0(%arg0: i32, %arg1: i32) -> (i32, i32) {
    %c0_i32 = arith.constant 0 : i32
    %c0_i32_0 = arith.constant 0 : i32
    return %arg0, %c0_i32 : i32, i32
  }
  func.func @transform_1(%arg0: i32, %arg1: i32) -> (i32, i32, i32) {
    %c0_i32 = arith.constant 0 : i32
    %c0_i32_0 = arith.constant 0 : i32
    %c0_i32_1 = arith.constant 0 : i32
    return %c0_i32, %c0_i32_0, %arg1 : i32, i32, i32
  }
  func.func @transform_2(%arg0: i32, %arg1: i32) -> (i32, i32) {
    %c0_i32 = arith.constant 0 : i32
    %c0_i32_0 = arith.constant 0 : i32
    return %arg1, %c0_i32 : i32, i32
  }
  func.func @transform_3(%arg0: i32, %arg1: i32) -> (i32, i32) {
    %c0_i32 = arith.constant 0 : i32
    %c0_i32_0 = arith.constant 0 : i32
    return %arg0, %c0_i32 : i32, i32
  }
}

</mosaic_0001>

<llo_original>
// kernel: tpu_custom_call.1
$region0: #{tpu_custom_call.1}
  #allocation0 [shape = 'u32[]', space=smem, size = 0x4, offset = 0x4, fixed_abs, tag = 'smem constant byte address 0x4 - core index']
  #allocation1 [shape = 'u32[72,128]{1,0:T(1,128)}', space=vmem, size = 0x9000, scoped, tag = 'internal scratch']
  #allocation2 [shape = 'f32[16,256]{1,0:T(8,128)}', space=vmem, size = 0x4000, scoped, tag = 'scratch operand']
  %s0 = inlined_call_operand.hbm [shape: bf16[32,256], index: 0, kind: input, shape index: {}]
  %s1 = inlined_call_operand.hbm [shape: bf16[2,256,768], index: 1, kind: input, shape index: {}]
  %s2 = inlined_call_operand.hbm [shape: bf16[768,256], index: 2, kind: input, shape index: {}]
  %s3 = inlined_call_operand.hbm [shape: bf16[32,256], index: 3, kind: output, shape index: {}]
  %s4 = sld [smem:[#allocation0]]
  $region65: #{tpu_custom_call.1} parent=0
    _
  %s6 = ssub.s32 1, %s4
  %s7 = scalar_select 0, %s6, %s4
  $region1: #{tpu_custom_call.1} parent=0
    #allocation3 [shape = 'u8[16384]{0}', space=vmem, size = 0x4000, scoped, tag = 'input window, operand 0']
    #allocation4 [shape = 's32[2]{0}', space=sflag, size = 0x8, scoped, tag = 'scoped memory for tpu_custom_call.1']
    #allocation5 [shape = 's32[2]{0}', space=sflag, size = 0x8, scoped, tag = 'scoped memory for tpu_custom_call.1']
    #allocation6 [shape = 'u8[524288]{0}', space=vmem, size = 0x80000, scoped, tag = 'input window, operand 1']
    #allocation7 [shape = 's32[2]{0}', space=sflag, size = 0x8, scoped, tag = 'scoped memory for tpu_custom_call.1']
    #allocation8 [shape = 'u8[262144]{0}', space=vmem, size = 0x40000, scoped, tag = 'input window, operand 2']
    #allocation9 [shape = 'u8[16384]{0}', space=vmem, size = 0x4000, scoped, tag = 'output window, operand 0']
    %8 = vsyncpa [#allocation4], 0
    %s9 = scalar_lea.sflag [#allocation4], 1
    %10 = vsyncpa %s9, 0
    %11 = vsyncpa [#allocation7], 0
    %s12 = scalar_lea.sflag [#allocation7], 1
    %13 = vsyncpa %s12, 0
    %14 = vsyncpa [#allocation5], 0
    %s15 = scalar_lea.sflag [#allocation5], 1
    %16 = vsyncpa %s15, 0
    loop: start=0, step=1, limit=8
    $region2: #{tpu_custom_call.1} parent=1 // loop_pre_header
      _
    $region3: #{tpu_custom_call.1} parent=1 // loop_header
      %s18 = sphi 0, %s22
      %p19 = scmp.ge.s32.totalorder %s18, 8
      %s25 = sphi 0, %s37
      %s26 = sphi 0, %s33
      %s27 = sphi 0, %s25
      %s28 = sphi 0, %s26
      %s29 = sphi 0, %s27
      %s30 = sphi 0, %s28
      %s40 = sphi 0, %s42
      %s43 = sphi 0, %s40
      %s44 = sphi 0, %s43
      %s60 = sphi 0, %s44
      %s66 = sphi 0, %s68
      %s69 = sphi 0, %s66
      %s70 = sphi 0, %s69
      %s86 = sphi 0, %s70
      %s92 = sphi 0, %s94
      %s95 = sphi 0, %s92
      %s96 = sphi 0, %s95
      %s112 = sphi 0, %s96
      %s118 = sphi 0, %s120
      %s121 = sphi 0, %s118
      %s122 = sphi 0, %s121
      %s138 = sphi 0, %s122
    $region4: #{tpu_custom_call.1} parent=1 // loop_header_branch
      %21 = sbr.rel (%p19) target = $region8
    $region5: #{tpu_custom_call.1} parent=1 // loop_body
      %s23 = ssub.s32 %s18, 1
      %s24 = ssub.s32 %s18, 2
      %s31 = sadd.s32 1, %s26
      %p32 = scmp.ge.s32.totalorder %s31, 3
      %s33 = scalar_select %p32, 0, %s31
      %s34 = sadd.s32 1, %s25
      %s35 = scalar_select %p32, %s34, %s25
      %p36 = scmp.ge.s32.totalorder %s35, 2
      %s37 = scalar_select %p36, 0, %s35
      %s38 = ssub.s32 %s25, %s37
      %p39 = scmp.eq.s32.totalorder %s38, 0
      %s41 = sadd.s32 %s40, 1
      %s42 = scalar_select %p39, %s40, %s41
      %p45 = pneg %p39
      %p46 = scmp.eq.s32.totalorder %s18, 5
      %p47 = por %p45, %p46
      %p48 = scmp.ne.s32.totalorder %s40, %s43
      %p49 = scmp.eq.s32.totalorder %s18, 0
      %p50 = por %p48, %p49
      %p51 = scmp.ne.s32.totalorder %s40, %s43
      %p52 = scmp.eq.s32.totalorder %s23, 5
      %p53 = por %p51, %p52
      %p54 = scmp.ne.s32.totalorder %s43, %s44
      %p55 = scmp.eq.s32.totalorder %s23, 0
      %p56 = por %p54, %p55
      %p57 = scmp.ne.s32.totalorder %s43, %s44
      %p58 = scmp.eq.s32.totalorder %s24, 5
      %p59 = por %p57, %p58
      %p61 = scmp.ne.s32.totalorder %s44, %s60
      %p62 = scmp.eq.s32.totalorder %s24, 0
      %p63 = por %p61, %p62
      %s64 = ssub.s32 %s26, %s33
      %p65 = scmp.eq.s32.totalorder %s64, 0
      %s67 = sadd.s32 %s66, 1
      %s68 = scalar_select %p65, %s66, %s67
      %p71 = pneg %p65
      %p72 = scmp.eq.s32.totalorder %s18, 5
      %p73 = por %p71, %p72
      %p74 = scmp.ne.s32.totalorder %s66, %s69
      %p75 = scmp.eq.s32.totalorder %s18, 0
      %p76 = por %p74, %p75
      %p77 = scmp.ne.s32.totalorder %s66, %s69
      %p78 = scmp.eq.s32.totalorder %s23, 5
      %p79 = por %p77, %p78
      %p80 = scmp.ne.s32.totalorder %s69, %s70
      %p81 = scmp.eq.s32.totalorder %s23, 0
      %p82 = por %p80, %p81
      %p83 = scmp.ne.s32.totalorder %s69, %s70
      %p84 = scmp.eq.s32.totalorder %s24, 5
      %p85 = por %p83, %p84
      %p87 = scmp.ne.s32.totalorder %s70, %s86
      %p88 = scmp.eq.s32.totalorder %s24, 0
      %p89 = por %p87, %p88
      %s90 = ssub.s32 %s26, %s33
      %p91 = scmp.eq.s32.totalorder %s90, 0
      %s93 = sadd.s32 %s92, 1
      %s94 = scalar_select %p91, %s92, %s93
      %p97 = pneg %p91
      %p98 = scmp.eq.s32.totalorder %s18, 5
      %p99 = por %p97, %p98
      %p100 = scmp.ne.s32.totalorder %s92, %s95
      %p101 = scmp.eq.s32.totalorder %s18, 0
      %p102 = por %p100, %p101
      %p103 = scmp.ne.s32.totalorder %s92, %s95
      %p104 = scmp.eq.s32.totalorder %s23, 5
      %p105 = por %p103, %p104
      %p106 = scmp.ne.s32.totalorder %s95, %s96
      %p107 = scmp.eq.s32.totalorder %s23, 0
      %p108 = por %p106, %p107
      %p109 = scmp.ne.s32.totalorder %s95, %s96
      %p110 = scmp.eq.s32.totalorder %s24, 5
      %p111 = por %p109, %p110
      %p113 = scmp.ne.s32.totalorder %s96, %s112
      %p114 = scmp.eq.s32.totalorder %s24, 0
      %p115 = por %p113, %p114
      %s116 = ssub.s32 %s25, %s37
      %p117 = scmp.eq.s32.totalorder %s116, 0
      %s119 = sadd.s32 %s118, 1
      %s120 = scalar_select %p117, %s118, %s119
      %p123 = pneg %p117
      %p124 = scmp.eq.s32.totalorder %s18, 5
      %p125 = por %p123, %p124
      %p126 = scmp.ne.s32.totalorder %s118, %s121
      %p127 = scmp.eq.s32.totalorder %s18, 0
      %p128 = por %p126, %p127
      %p129 = scmp.ne.s32.totalorder %s118, %s121
      %p130 = scmp.eq.s32.totalorder %s23, 5
      %p131 = por %p129, %p130
      %p132 = scmp.ne.s32.totalorder %s121, %s122
      %p133 = scmp.eq.s32.totalorder %s23, 0
      %p134 = por %p132, %p133
      %p135 = scmp.ne.s32.totalorder %s121, %s122
      %p136 = scmp.eq.s32.totalorder %s24, 5
      %p137 = por %p135, %p136
      %p139 = scmp.ne.s32.totalorder %s122, %s138
      %p140 = scmp.eq.s32.totalorder %s24, 0
      %p141 = por %p139, %p140
      %p142 = scmp.le.s32.totalorder 1, %s18
      %p143 = scmp.lt.s32.totalorder %s18, 7
      %p144 = pnand %p142, %p143
      %p145 = pneg %p144
      // Predicated region
      $region9: #{tpu_custom_call.1} parent=5 // pred_check
        _
      $region10: #{tpu_custom_call.1} parent=5 // pred_check_branch
        %147 = sbr.rel (%p144) target = $region12
      $region11: #{tpu_custom_call.1} parent=5 // pred_region
        %s148 = ssub.s32 %s18, 1
      $region12: #{tpu_custom_call.1} parent=5 // pred_fallthru
        _
      %p149 = scmp.lt.s32.totalorder %s18, 6
      // Predicated region
      $region13: #{tpu_custom_call.1} parent=5 // pred_check
        %p150 = pneg %p149
      $region14: #{tpu_custom_call.1} parent=5 // pred_check_branch
        %152 = sbr.rel (%p150) target = $region16
      $region15: #{tpu_custom_call.1} parent=5 // pred_region
        // Predicated region
        $region17: #{tpu_custom_call.1} parent=15 // pred_check
          %p153 = pneg %p50
        $region18: #{tpu_custom_call.1} parent=15 // pred_check_branch
          %155 = sbr.rel (%p153) target = $region20
        $region19: #{tpu_custom_call.1} parent=15 // pred_region
          %s156 = sand.u32 %s40, 1
          %s157 = scalar_lea.sflag [#allocation4], %s156
          %s158 = sand.u32 %s40, 1
          %s159 = smul.addr %s158, 16
          %s160 = scalar_lea.vmem [#allocation3], %s159
          %s161 = smul.u32 2, %s25
          %163 = vsyncadd %s157, 0
          %s164 = smul.addr %s161, 2
          %s165 = smul.addr %s164, 4
          %s166 = scalar_lea.hbm %s0, %s165
          %s167 = sshll.u32 %s166, 4
          %s168 = int_to_ptr.hbm [resolvable:$true] %s167
          %s169 = sshll.u32 %s160, 4
          %s170 = int_to_ptr.vmem [resolvable:$true] %s169
          %175 = dma.hbm_to_vmem [thread:$0]  %s168, 256, %s170, %s157, 128, 128, 8
        $region20: #{tpu_custom_call.1} parent=15 // pred_fallthru
          _
        // Predicated region
        $region21: #{tpu_custom_call.1} parent=15 // pred_check
          %p176 = pneg %p76
        $region22: #{tpu_custom_call.1} parent=15 // pred_check_branch
          %178 = sbr.rel (%p176) target = $region24
        $region23: #{tpu_custom_call.1} parent=15 // pred_region
          %s179 = sand.u32 %s18, 1
          %s180 = scalar_lea.sflag [#allocation7], %s179
          %s181 = sand.u32 %s66, 1
          %s182 = smul.addr %s181, 512
          %s183 = scalar_lea.vmem [#allocation6], %s182
          %s184 = smul.u32 2, %s26
          %186 = vsyncadd %s180, 0
          %s187 = smul.addr %s184, 4
          %s188 = scalar_lea.hbm %s1, %s187
          %s189 = sshll.u32 %s188, 4
          %s190 = int_to_ptr.hbm [resolvable:$true] %s189
          %s191 = sshll.u32 %s183, 4
          %s192 = int_to_ptr.vmem [resolvable:$true] %s191
          %197 = dma.hbm_to_vmem [thread:$0]  %s190, 8192, %s192, %s180, 384, 128, 8
        $region24: #{tpu_custom_call.1} parent=15 // pred_fallthru
          _
        // Predicated region
        $region25: #{tpu_custom_call.1} parent=15 // pred_check
          %p198 = pneg %p102
        $region26: #{tpu_custom_call.1} parent=15 // pred_check_branch
          %200 = sbr.rel (%p198) target = $region28
        $region27: #{tpu_custom_call.1} parent=15 // pred_region
          %s201 = sand.u32 %s18, 1
          %s202 = scalar_lea.sflag [#allocation7], %s201
          %s203 = sand.u32 %s92, 1
          %s204 = smul.addr %s203, 256
          %s205 = scalar_lea.vmem [#allocation8], %s204
          %s206 = smul.u32 32, %s26
          %208 = vsyncadd %s202, 0
          %s209 = smul.addr %s206, 2
          %s210 = smul.addr %s209, 4
          %s211 = scalar_lea.hbm %s2, %s210
          %s212 = sshll.u32 %s211, 4
          %s213 = int_to_ptr.hbm [resolvable:$true] %s212
          %s214 = sshll.u32 %s205, 4
          %s215 = int_to_ptr.vmem [resolvable:$true] %s214
          %220 = dma.hbm_to_vmem [thread:$0]  %s213, 4096, %s215, %s202, 128, 128, 8
        $region28: #{tpu_custom_call.1} parent=15 // pred_fallthru
          _
      $region16: #{tpu_custom_call.1} parent=5 // pred_fallthru
        _
      %p221 = scmp.le.s32.totalorder 1, %s18
      %p222 = scmp.lt.s32.totalorder %s18, 7
      %p223 = pnand %p221, %p222
      %p224 = pneg %p223
      // Predicated region
      $region29: #{tpu_custom_call.1} parent=5 // pred_check
        _
      $region30: #{tpu_custom_call.1} parent=5 // pred_check_branch
        %226 = sbr.rel (%p223) target = $region32
      $region31: #{tpu_custom_call.1} parent=5 // pred_region
        %s227 = ssub.s32 %s18, 1
        %s228 = sand.u32 %s43, 1
        %s229 = scalar_lea.sflag [#allocation4], %s228
        %s230 = sand.u32 %s43, 1
        %s231 = smul.addr %s230, 16
        %s232 = scalar_lea.vmem [#allocation3], %s231
        // Predicated region
        $region33: #{tpu_custom_call.1} parent=31 // pred_check
          %p233 = pneg %p56
        $region34: #{tpu_custom_call.1} parent=31 // pred_check_branch
          %235 = sbr.rel (%p233) target = $region36
        $region35: #{tpu_custom_call.1} parent=31 // pred_region
          %237 = dma.done %s229, 256
        $region36: #{tpu_custom_call.1} parent=31 // pred_fallthru
          _
        %s238 = sand.u32 %s23, 1
        %s239 = scalar_lea.sflag [#allocation7], %s238
        %s240 = sand.u32 %s69, 1
        %s241 = smul.addr %s240, 512
        %s242 = scalar_lea.vmem [#allocation6], %s241
        // Predicated region
        $region37: #{tpu_custom_call.1} parent=31 // pred_check
          %p243 = pneg %p82
        $region38: #{tpu_custom_call.1} parent=31 // pred_check_branch
          %245 = sbr.rel (%p243) target = $region40
        $region39: #{tpu_custom_call.1} parent=31 // pred_region
          %247 = dma.done %s239, 8192
        $region40: #{tpu_custom_call.1} parent=31 // pred_fallthru
          _
        %s248 = sand.u32 %s23, 1
        %s249 = scalar_lea.sflag [#allocation7], %s248
        %s250 = sand.u32 %s95, 1
        %s251 = smul.addr %s250, 256
        %s252 = scalar_lea.vmem [#allocation8], %s251
        // Predicated region
        $region41: #{tpu_custom_call.1} parent=31 // pred_check
          %p253 = pneg %p108
        $region42: #{tpu_custom_call.1} parent=31 // pred_check_branch
          %255 = sbr.rel (%p253) target = $region44
        $region43: #{tpu_custom_call.1} parent=31 // pred_region
          %257 = dma.done %s249, 4096
        $region44: #{tpu_custom_call.1} parent=31 // pred_fallthru
          _
        %s258 = sand.u32 %s43, 1
        %s259 = scalar_lea.sflag [#allocation4], %s258
        %s260 = sand.u32 %s43, 1
        %s261 = smul.addr %s260, 16
        %s262 = scalar_lea.vmem [#allocation3], %s261
        %p263 = pneg %p56
        %p264 = pneg %p53
        %s265 = sand.u32 %s23, 1
        %s266 = scalar_lea.sflag [#allocation7], %s265
        %s267 = sand.u32 %s69, 1
        %s268 = smul.addr %s267, 512
        %s269 = scalar_lea.vmem [#allocation6], %s268
        %p270 = pneg %p82
        %p271 = pneg %p79
        %s272 = sand.u32 %s23, 1
        %s273 = scalar_lea.sflag [#allocation7], %s272
        %s274 = sand.u32 %s95, 1
        %s275 = smul.addr %s274, 256
        %s276 = scalar_lea.vmem [#allocation8], %s275
        %p277 = pneg %p108
        %p278 = pneg %p105
        %p279 = pneg %p134
        %p280 = pneg %p131
        %s281 = sand.u32 %s121, 1
        %s282 = scalar_lea.sflag [#allocation5], %s281
        %s283 = sand.u32 %s121, 1
        %s284 = smul.addr %s283, 16
        %s285 = scalar_lea.vmem [#allocation9], %s284
        %s286 = smul.u32 2, %s27
        %s287 = smul.u32 2, %s28
        %s288 = smul.u32 32, %s28
        %s289 = smul.u32 2, %s27
        %p290 = scmp.eq.s32.totalorder %s28, 0
        // Predicated region
        $region45: #{tpu_custom_call.1} parent=31 // pred_check
          %p291 = pneg %p290
        $region46: #{tpu_custom_call.1} parent=31 // pred_check_branch
          %293 = sbr.rel (%p291) target = $region48
        $region47: #{tpu_custom_call.1} parent=31 // pred_region
          %294 = vst [vmem:[#allocation2] sm:$0xff] 0.0
          %295 = vst [vmem:[#allocation2 + $0x8] sm:$0xff] 0.0
          %296 = vst [vmem:[#allocation2 + $0x10] sm:$0xff] 0.0
          %297 = vst [vmem:[#allocation2 + $0x18] sm:$0xff] 0.0
        $region48: #{tpu_custom_call.1} parent=31 // pred_fallthru
          _
        %v298 = vld [vmem:[%s232] sm:$0xff]
        %v299 = vld [vmem:[%s232 + $0x8] sm:$0xff]
        %v300 = vld [vmem:[%s242] sm:$0xff]
        %v301 = vld [vmem:[%s242 + $0x8] sm:$0xff]
        %v302 = vld [vmem:[%s242 + $0x10] sm:$0xff]
        %v303 = vld [vmem:[%s242 + $0x18] sm:$0xff]
        %v304 = vld [vmem:[%s242 + $0x20] sm:$0xff]
        %v305 = vld [vmem:[%s242 + $0x28] sm:$0xff]
        %v306 = vld [vmem:[%s242 + $0x30] sm:$0xff]
        %v307 = vld [vmem:[%s242 + $0x38] sm:$0xff]
        %v308 = vld [vmem:[%s242 + $0x40] sm:$0xff]
        %v309 = vld [vmem:[%s242 + $0x48] sm:$0xff]
        %v310 = vld [vmem:[%s242 + $0x50] sm:$0xff]
        %v311 = vld [vmem:[%s242 + $0x58] sm:$0xff]
        %v312 = vld [vmem:[%s242 + $0x60] sm:$0xff]
        %v313 = vld [vmem:[%s242 + $0x68] sm:$0xff]
        %v314 = vld [vmem:[%s242 + $0x70] sm:$0xff]
        %v315 = vld [vmem:[%s242 + $0x78] sm:$0xff]
        %v316 = vld [vmem:[%s242 + $0x80] sm:$0xff]
        %v317 = vld [vmem:[%s242 + $0x88] sm:$0xff]
        %v318 = vld [vmem:[%s242 + $0x90] sm:$0xff]
        %v319 = vld [vmem:[%s242 + $0x98] sm:$0xff]
        %v320 = vld [vmem:[%s242 + $0xa0] sm:$0xff]
        %v321 = vld [vmem:[%s242 + $0xa8] sm:$0xff]
        %v322 = vld [vmem:[%s242 + $0xb0] sm:$0xff]
        %v323 = vld [vmem:[%s242 + $0xb8] sm:$0xff]
        %v324 = vld [vmem:[%s242 + $0xc0] sm:$0xff]
        %v325 = vld [vmem:[%s242 + $0xc8] sm:$0xff]
        %v326 = vld [vmem:[%s242 + $0xd0] sm:$0xff]
        %v327 = vld [vmem:[%s242 + $0xd8] sm:$0xff]
        %v328 = vld [vmem:[%s242 + $0xe0] sm:$0xff]
        %v329 = vld [vmem:[%s242 + $0xe8] sm:$0xff]
        %v330 = vld [vmem:[%s242 + $0xf0] sm:$0xff]
        %v331 = vld [vmem:[%s242 + $0xf8] sm:$0xff]
        %v334 = vunpack.c.l.b16 %v298
        %v335 = vunpack.c.h.b16 %v298
        %v336 = vunpack.c.l.b16 %v299
        %v337 = vunpack.c.h.b16 %v299
        %v338 = vpack.c.b16 %v336, %v334
        %v339 = vpack.c.b16 %v337, %v335
        %v374 = vunpack.c.l.b16 %v300
        %v375 = vunpack.c.h.b16 %v300
        %v376 = vunpack.c.l.b16 %v301
        %v377 = vunpack.c.h.b16 %v301
        %v378 = vunpack.c.l.b16 %v302
        %v379 = vunpack.c.h.b16 %v302
        %v380 = vunpack.c.l.b16 %v303
        %v381 = vunpack.c.h.b16 %v303
        %v382 = vunpack.c.l.b16 %v304
        %v383 = vunpack.c.h.b16 %v304
        %v384 = vunpack.c.l.b16 %v305
        %v385 = vunpack.c.h.b16 %v305
        %v386 = vunpack.c.l.b16 %v306
        %v387 = vunpack.c.h.b16 %v306
        %v388 = vunpack.c.l.b16 %v307
        %v389 = vunpack.c.h.b16 %v307
        %v390 = vunpack.c.l.b16 %v308
        %v391 = vunpack.c.h.b16 %v308
        %v392 = vunpack.c.l.b16 %v309
        %v393 = vunpack.c.h.b16 %v309
        %v394 = vunpack.c.l.b16 %v310
        %v395 = vunpack.c.h.b16 %v310
        %v396 = vunpack.c.l.b16 %v311
        %v397 = vunpack.c.h.b16 %v311
        %v398 = vunpack.c.l.b16 %v312
        %v399 = vunpack.c.h.b16 %v312
        %v400 = vunpack.c.l.b16 %v313
        %v401 = vunpack.c.h.b16 %v313
        %v402 = vunpack.c.l.b16 %v314
        %v403 = vunpack.c.h.b16 %v314
        %v404 = vunpack.c.l.b16 %v315
        %v405 = vunpack.c.h.b16 %v315
        %v406 = vunpack.c.l.b16 %v316
        %v407 = vunpack.c.h.b16 %v316
        %v408 = vunpack.c.l.b16 %v317
        %v409 = vunpack.c.h.b16 %v317
        %v410 = vunpack.c.l.b16 %v318
        %v411 = vunpack.c.h.b16 %v318
        %v412 = vunpack.c.l.b16 %v319
        %v413 = vunpack.c.h.b16 %v319
        %v414 = vunpack.c.l.b16 %v320
        %v415 = vunpack.c.h.b16 %v320
        %v416 = vunpack.c.l.b16 %v321
        %v417 = vunpack.c.h.b16 %v321
        %v418 = vunpack.c.l.b16 %v322
        %v419 = vunpack.c.h.b16 %v322
        %v420 = vunpack.c.l.b16 %v323
        %v421 = vunpack.c.h.b16 %v323
        %v422 = vunpack.c.l.b16 %v324
        %v423 = vunpack.c.h.b16 %v324
        %v424 = vunpack.c.l.b16 %v325
        %v425 = vunpack.c.h.b16 %v325
        %v426 = vunpack.c.l.b16 %v326
        %v427 = vunpack.c.h.b16 %v326
        %v428 = vunpack.c.l.b16 %v327
        %v429 = vunpack.c.h.b16 %v327
        %v430 = vunpack.c.l.b16 %v328
        %v431 = vunpack.c.h.b16 %v328
        %v432 = vunpack.c.l.b16 %v329
        %v433 = vunpack.c.h.b16 %v329
        %v434 = vunpack.c.l.b16 %v330
        %v435 = vunpack.c.h.b16 %v330
        %v436 = vunpack.c.l.b16 %v331
        %v437 = vunpack.c.h.b16 %v331
        %v438 = vpack.c.b16 %v376, %v374
        %v439 = vpack.c.b16 %v377, %v375
        %v440 = vpack.c.b16 %v380, %v378
        %v441 = vpack.c.b16 %v381, %v379
        %v442 = vpack.c.b16 %v384, %v382
        %v443 = vpack.c.b16 %v385, %v383
        %v444 = vpack.c.b16 %v388, %v386
        %v445 = vpack.c.b16 %v389, %v387
        %v446 = vpack.c.b16 %v392, %v390
        %v447 = vpack.c.b16 %v393, %v391
        %v448 = vpack.c.b16 %v396, %v394
        %v449 = vpack.c.b16 %v397, %v395
        %v450 = vpack.c.b16 %v400, %v398
        %v451 = vpack.c.b16 %v401, %v399
        %v452 = vpack.c.b16 %v404, %v402
        %v453 = vpack.c.b16 %v405, %v403
        %v454 = vpack.c.b16 %v408, %v406
        %v455 = vpack.c.b16 %v409, %v407
        %v456 = vpack.c.b16 %v412, %v410
        %v457 = vpack.c.b16 %v413, %v411
        %v458 = vpack.c.b16 %v416, %v414
        %v459 = vpack.c.b16 %v417, %v415
        %v460 = vpack.c.b16 %v420, %v418
        %v461 = vpack.c.b16 %v421, %v419
        %v462 = vpack.c.b16 %v424, %v422
        %v463 = vpack.c.b16 %v425, %v423
        %v464 = vpack.c.b16 %v428, %v426
        %v465 = vpack.c.b16 %v429, %v427
        %v466 = vpack.c.b16 %v432, %v430
        %v467 = vpack.c.b16 %v433, %v431
        %v468 = vpack.c.b16 %v436, %v434
        %v469 = vpack.c.b16 %v437, %v435
        %502 = vmatpush.bf16.msra.mxu0 %v452
        %503 = vmatpush.bf16.msra.mxu0 %v450
        %504 = vmatpush.bf16.msra.mxu0 %v448
        %505 = vmatpush.bf16.msra.mxu0 %v446
        %506 = vmatpush.bf16.msra.mxu0 %v444
        %507 = vmatpush.bf16.msra.mxu0 %v442
        %508 = vmatpush.bf16.msra.mxu0 %v440
        %509 = vmatpush.bf16.msra.mxu0 %v438
        %510 = vmatmul.bf16.gmra.mxu0 %v338
        %v511 = vpop.f32.mrf.mxu0
        %v512 = vadd.f32 0.0, %v511
        %v513 = vpop.f32.mrf.mxu0
        %v514 = vadd.f32 0.0, %v513
        %515 = vdwg.mxu0
        %516 = vmatpush.bf16.msra.mxu0 %v468
        %517 = vmatpush.bf16.msra.mxu0 %v466
        %518 = vmatpush.bf16.msra.mxu0 %v464
        %519 = vmatpush.bf16.msra.mxu0 %v462
        %520 = vmatpush.bf16.msra.mxu0 %v460
        %521 = vmatpush.bf16.msra.mxu0 %v458
        %522 = vmatpush.bf16.msra.mxu0 %v456
        %523 = vmatpush.bf16.msra.mxu0 %v454
        %524 = vmatmul.bf16.gmra.mxu0 %v339
        %v525 = vpop.f32.mrf.mxu0
        %v526 = vadd.f32 %v512, %v525
        %v527 = vpop.f32.mrf.mxu0
        %v528 = vadd.f32 %v514, %v527
        %529 = vdwg.mxu0
        %530 = vmatpush.bf16.msra.mxu0 %v453
        %531 = vmatpush.bf16.msra.mxu0 %v451
        %532 = vmatpush.bf16.msra.mxu0 %v449
        %533 = vmatpush.bf16.msra.mxu0 %v447
        %534 = vmatpush.bf16.msra.mxu0 %v445
        %535 = vmatpush.bf16.msra.mxu0 %v443
        %536 = vmatpush.bf16.msra.mxu0 %v441
        %537 = vmatpush.bf16.msra.mxu0 %v439
        %538 = vmatmul.bf16.gmra.mxu0 %v338
        %v539 = vpop.f32.mrf.mxu0
        %v540 = vadd.f32 0.0, %v539
        %v541 = vpop.f32.mrf.mxu0
        %v542 = vadd.f32 0.0, %v541
        %543 = vdwg.mxu0
        %544 = vmatpush.bf16.msra.mxu0 %v469
        %545 = vmatpush.bf16.msra.mxu0 %v467
        %546 = vmatpush.bf16.msra.mxu0 %v465
        %547 = vmatpush.bf16.msra.mxu0 %v463
        %548 = vmatpush.bf16.msra.mxu0 %v461
        %549 = vmatpush.bf16.msra.mxu0 %v459
        %550 = vmatpush.bf16.msra.mxu0 %v457
        %551 = vmatpush.bf16.msra.mxu0 %v455
        %552 = vmatmul.bf16.gmra.mxu0 %v339
        %v553 = vpop.f32.mrf.mxu0
        %v554 = vadd.f32 %v540, %v553
        %v555 = vpop.f32.mrf.mxu0
        %v556 = vadd.f32 %v542, %v555
        %557 = vdwg.mxu0
        %s558 = scalar_lea.vmem %s242, 256 [#allocation6]
        %v559 = vld [vmem:[%s558] sm:$0xff]
        %v560 = vld [vmem:[%s558 + $0x8] sm:$0xff]
        %v561 = vld [vmem:[%s558 + $0x10] sm:$0xff]
        %v562 = vld [vmem:[%s558 + $0x18] sm:$0xff]
        %v563 = vld [vmem:[%s558 + $0x20] sm:$0xff]
        %v564 = vld [vmem:[%s558 + $0x28] sm:$0xff]
        %v565 = vld [vmem:[%s558 + $0x30] sm:$0xff]
        %v566 = vld [vmem:[%s558 + $0x38] sm:$0xff]
        %v567 = vld [vmem:[%s558 + $0x40] sm:$0xff]
        %v568 = vld [vmem:[%s558 + $0x48] sm:$0xff]
        %v569 = vld [vmem:[%s558 + $0x50] sm:$0xff]
        %v570 = vld [vmem:[%s558 + $0x58] sm:$0xff]
        %v571 = vld [vmem:[%s558 + $0x60] sm:$0xff]
        %v572 = vld [vmem:[%s558 + $0x68] sm:$0xff]
        %v573 = vld [vmem:[%s558 + $0x70] sm:$0xff]
        %v574 = vld [vmem:[%s558 + $0x78] sm:$0xff]
        %v575 = vld [vmem:[%s558 + $0x80] sm:$0xff]
        %v576 = vld [vmem:[%s558 + $0x88] sm:$0xff]
        %v577 = vld [vmem:[%s558 + $0x90] sm:$0xff]
        %v578 = vld [vmem:[%s558 + $0x98] sm:$0xff]
        %v579 = vld [vmem:[%s558 + $0xa0] sm:$0xff]
        %v580 = vld [vmem:[%s558 + $0xa8] sm:$0xff]
        %v581 = vld [vmem:[%s558 + $0xb0] sm:$0xff]
        %v582 = vld [vmem:[%s558 + $0xb8] sm:$0xff]
        %v583 = vld [vmem:[%s558 + $0xc0] sm:$0xff]
        %v584 = vld [vmem:[%s558 + $0xc8] sm:$0xff]
        %v585 = vld [vmem:[%s558 + $0xd0] sm:$0xff]
        %v586 = vld [vmem:[%s558 + $0xd8] sm:$0xff]
        %v587 = vld [vmem:[%s558 + $0xe0] sm:$0xff]
        %v588 = vld [vmem:[%s558 + $0xe8] sm:$0xff]
        %v589 = vld [vmem:[%s558 + $0xf0] sm:$0xff]
        %v590 = vld [vmem:[%s558 + $0xf8] sm:$0xff]
        %v623 = vunpack.c.l.b16 %v559
        %v624 = vunpack.c.h.b16 %v559
        %v625 = vunpack.c.l.b16 %v560
        %v626 = vunpack.c.h.b16 %v560
        %v627 = vunpack.c.l.b16 %v561
        %v628 = vunpack.c.h.b16 %v561
        %v629 = vunpack.c.l.b16 %v562
        %v630 = vunpack.c.h.b16 %v562
        %v631 = vunpack.c.l.b16 %v563
        %v632 = vunpack.c.h.b16 %v563
        %v633 = vunpack.c.l.b16 %v564
        %v634 = vunpack.c.h.b16 %v564
        %v635 = vunpack.c.l.b16 %v565
        %v636 = vunpack.c.h.b16 %v565
        %v637 = vunpack.c.l.b16 %v566
        %v638 = vunpack.c.h.b16 %v566
        %v639 = vunpack.c.l.b16 %v567
        %v640 = vunpack.c.h.b16 %v567
        %v641 = vunpack.c.l.b16 %v568
        %v642 = vunpack.c.h.b16 %v568
        %v643 = vunpack.c.l.b16 %v569
        %v644 = vunpack.c.h.b16 %v569
        %v645 = vunpack.c.l.b16 %v570
        %v646 = vunpack.c.h.b16 %v570
        %v647 = vunpack.c.l.b16 %v571
        %v648 = vunpack.c.h.b16 %v571
        %v649 = vunpack.c.l.b16 %v572
        %v650 = vunpack.c.h.b16 %v572
        %v651 = vunpack.c.l.b16 %v573
        %v652 = vunpack.c.h.b16 %v573
        %v653 = vunpack.c.l.b16 %v574
        %v654 = vunpack.c.h.b16 %v574
        %v655 = vunpack.c.l.b16 %v575
        %v656 = vunpack.c.h.b16 %v575
        %v657 = vunpack.c.l.b16 %v576
        %v658 = vunpack.c.h.b16 %v576
        %v659 = vunpack.c.l.b16 %v577
        %v660 = vunpack.c.h.b16 %v577
        %v661 = vunpack.c.l.b16 %v578
        %v662 = vunpack.c.h.b16 %v578
        %v663 = vunpack.c.l.b16 %v579
        %v664 = vunpack.c.h.b16 %v579
        %v665 = vunpack.c.l.b16 %v580
        %v666 = vunpack.c.h.b16 %v580
        %v667 = vunpack.c.l.b16 %v581
        %v668 = vunpack.c.h.b16 %v581
        %v669 = vunpack.c.l.b16 %v582
        %v670 = vunpack.c.h.b16 %v582
        %v671 = vunpack.c.l.b16 %v583
        %v672 = vunpack.c.h.b16 %v583
        %v673 = vunpack.c.l.b16 %v584
        %v674 = vunpack.c.h.b16 %v584
        %v675 = vunpack.c.l.b16 %v585
        %v676 = vunpack.c.h.b16 %v585
        %v677 = vunpack.c.l.b16 %v586
        %v678 = vunpack.c.h.b16 %v586
        %v679 = vunpack.c.l.b16 %v587
        %v680 = vunpack.c.h.b16 %v587
        %v681 = vunpack.c.l.b16 %v588
        %v682 = vunpack.c.h.b16 %v588
        %v683 = vunpack.c.l.b16 %v589
        %v684 = vunpack.c.h.b16 %v589
        %v685 = vunpack.c.l.b16 %v590
        %v686 = vunpack.c.h.b16 %v590
        %v687 = vpack.c.b16 %v625, %v623
        %v688 = vpack.c.b16 %v626, %v624
        %v689 = vpack.c.b16 %v629, %v627
        %v690 = vpack.c.b16 %v630, %v628
        %v691 = vpack.c.b16 %v633, %v631
        %v692 = vpack.c.b16 %v634, %v632
        %v693 = vpack.c.b16 %v637, %v635
        %v694 = vpack.c.b16 %v638, %v636
        %v695 = vpack.c.b16 %v641, %v639
        %v696 = vpack.c.b16 %v642, %v640
        %v697 = vpack.c.b16 %v645, %v643
        %v698 = vpack.c.b16 %v646, %v644
        %v699 = vpack.c.b16 %v649, %v647
        %v700 = vpack.c.b16 %v650, %v648
        %v701 = vpack.c.b16 %v653, %v651
        %v702 = vpack.c.b16 %v654, %v652
        %v703 = vpack.c.b16 %v657, %v655
        %v704 = vpack.c.b16 %v658, %v656
        %v705 = vpack.c.b16 %v661, %v659
        %v706 = vpack.c.b16 %v662, %v660
        %v707 = vpack.c.b16 %v665, %v663
        %v708 = vpack.c.b16 %v666, %v664
        %v709 = vpack.c.b16 %v669, %v667
        %v710 = vpack.c.b16 %v670, %v668
        %v711 = vpack.c.b16 %v673, %v671
        %v712 = vpack.c.b16 %v674, %v672
        %v713 = vpack.c.b16 %v677, %v675
        %v714 = vpack.c.b16 %v678, %v676
        %v715 = vpack.c.b16 %v681, %v679
        %v716 = vpack.c.b16 %v682, %v680
        %v717 = vpack.c.b16 %v685, %v683
        %v718 = vpack.c.b16 %v686, %v684
        %751 = vmatpush.bf16.msra.mxu0 %v701
        %752 = vmatpush.bf16.msra.mxu0 %v699
        %753 = vmatpush.bf16.msra.mxu0 %v697
        %754 = vmatpush.bf16.msra.mxu0 %v695
        %755 = vmatpush.bf16.msra.mxu0 %v693
        %756 = vmatpush.bf16.msra.mxu0 %v691
        %757 = vmatpush.bf16.msra.mxu0 %v689
        %758 = vmatpush.bf16.msra.mxu0 %v687
        %759 = vmatmul.bf16.gmra.mxu0 %v338
        %v760 = vpop.f32.mrf.mxu0
        %v761 = vadd.f32 0.0, %v760
        %v762 = vpop.f32.mrf.mxu0
        %v763 = vadd.f32 0.0, %v762
        %764 = vdwg.mxu0
        %765 = vmatpush.bf16.msra.mxu0 %v717
        %766 = vmatpush.bf16.msra.mxu0 %v715
        %767 = vmatpush.bf16.msra.mxu0 %v713
        %768 = vmatpush.bf16.msra.mxu0 %v711
        %769 = vmatpush.bf16.msra.mxu0 %v709
        %770 = vmatpush.bf16.msra.mxu0 %v707
        %771 = vmatpush.bf16.msra.mxu0 %v705
        %772 = vmatpush.bf16.msra.mxu0 %v703
        %773 = vmatmul.bf16.gmra.mxu0 %v339
        %v774 = vpop.f32.mrf.mxu0
        %v775 = vadd.f32 %v761, %v774
        %v776 = vpop.f32.mrf.mxu0
        %v777 = vadd.f32 %v763, %v776
        %778 = vdwg.mxu0
        %779 = vmatpush.bf16.msra.mxu0 %v702
        %780 = vmatpush.bf16.msra.mxu0 %v700
        %781 = vmatpush.bf16.msra.mxu0 %v698
        %782 = vmatpush.bf16.msra.mxu0 %v696
        %783 = vmatpush.bf16.msra.mxu0 %v694
        %784 = vmatpush.bf16.msra.mxu0 %v692
        %785 = vmatpush.bf16.msra.mxu0 %v690
        %786 = vmatpush.bf16.msra.mxu0 %v688
        %787 = vmatmul.bf16.gmra.mxu0 %v338
        %v788 = vpop.f32.mrf.mxu0
        %v789 = vadd.f32 0.0, %v788
        %v790 = vpop.f32.mrf.mxu0
        %v791 = vadd.f32 0.0, %v790
        %792 = vdwg.mxu0
        %793 = vmatpush.bf16.msra.mxu0 %v718
        %794 = vmatpush.bf16.msra.mxu0 %v716
        %795 = vmatpush.bf16.msra.mxu0 %v714
        %796 = vmatpush.bf16.msra.mxu0 %v712
        %797 = vmatpush.bf16.msra.mxu0 %v710
        %798 = vmatpush.bf16.msra.mxu0 %v708
        %799 = vmatpush.bf16.msra.mxu0 %v706
        %800 = vmatpush.bf16.msra.mxu0 %v704
        %801 = vmatmul.bf16.gmra.mxu0 %v339
        %v802 = vpop.f32.mrf.mxu0
        %v803 = vadd.f32 %v789, %v802
        %v804 = vpop.f32.mrf.mxu0
        %v805 = vadd.f32 %v791, %v804
        %806 = vdwg.mxu0
        %v807 = vxor.u32 %v526, 2147483648
        %v808 = vxor.u32 %v554, 2147483648
        %v809 = vxor.u32 %v528, 2147483648
        %v810 = vxor.u32 %v556, 2147483648
        %v811 = vmul.f32 %v807, 1.442695
        %v812 = vpow.pop %v811
        %v813 = vmul.f32 %v808, 1.442695
        %v814 = vpow.pop %v813
        %v815 = vmul.f32 %v809, 1.442695
        %v816 = vpow.pop %v815
        %v817 = vmul.f32 %v810, 1.442695
        %v818 = vpow.pop %v817
        %v819 = vadd.f32 %v812, 1.0
        %v820 = vadd.f32 %v814, 1.0
        %v821 = vadd.f32 %v816, 1.0
        %v822 = vadd.f32 %v818, 1.0
        %v823 = vrcp.pop %v819
        %v824 = vmul.f32 %v819, %v823
        %v825 = vsub.f32 1.0, %v824
        %v826 = vmul.f32 %v823, %v825
        %v827 = vadd.f32 %v823, %v826
        %vm828 = vweird.f32 %v819
        %vm829 = vweird.f32 %v823
        %vm830 = vmor %vm828, %vm829
        %v831 = vsel %vm830, %v823, %v827
        %v832 = vand.u32 2147483647, %v819
        %vm833 = vcmp.eq.f32.partialorder %v832, 8.507059e+37
        %v834 = vand.u32 %v819, 2147483648
        %v835 = vor.u32 1.1754944e-38, %v834
        %v836 = vsel %vm833, %v835, %v831
        %v837 = vmul.f32 1.0, %v836
        %v838 = vrcp.pop %v820
        %v839 = vmul.f32 %v820, %v838
        %v840 = vsub.f32 1.0, %v839
        %v841 = vmul.f32 %v838, %v840
        %v842 = vadd.f32 %v838, %v841
        %vm843 = vweird.f32 %v820
        %vm844 = vweird.f32 %v838
        %vm845 = vmor %vm843, %vm844
        %v846 = vsel %vm845, %v838, %v842
        %v847 = vand.u32 2147483647, %v820
        %vm848 = vcmp.eq.f32.partialorder %v847, 8.507059e+37
        %v849 = vand.u32 %v820, 2147483648
        %v850 = vor.u32 1.1754944e-38, %v849
        %v851 = vsel %vm848, %v850, %v846
        %v852 = vmul.f32 1.0, %v851
        %v853 = vrcp.pop %v821
        %v854 = vmul.f32 %v821, %v853
        %v855 = vsub.f32 1.0, %v854
        %v856 = vmul.f32 %v853, %v855
        %v857 = vadd.f32 %v853, %v856
        %vm858 = vweird.f32 %v821
        %vm859 = vweird.f32 %v853
        %vm860 = vmor %vm858, %vm859
        %v861 = vsel %vm860, %v853, %v857
        %v862 = vand.u32 2147483647, %v821
        %vm863 = vcmp.eq.f32.partialorder %v862, 8.507059e+37
        %v864 = vand.u32 %v821, 2147483648
        %v865 = vor.u32 1.1754944e-38, %v864
        %v866 = vsel %vm863, %v865, %v861
        %v867 = vmul.f32 1.0, %v866
        %v868 = vrcp.pop %v822
        %v869 = vmul.f32 %v822, %v868
        %v870 = vsub.f32 1.0, %v869
        %v871 = vmul.f32 %v868, %v870
        %v872 = vadd.f32 %v868, %v871
        %vm873 = vweird.f32 %v822
        %vm874 = vweird.f32 %v868
        %vm875 = vmor %vm873, %vm874
        %v876 = vsel %vm875, %v868, %v872
        %v877 = vand.u32 2147483647, %v822
        %vm878 = vcmp.eq.f32.partialorder %v877, 8.507059e+37
        %v879 = vand.u32 %v822, 2147483648
        %v880 = vor.u32 1.1754944e-38, %v879
        %v881 = vsel %vm878, %v880, %v876
        %v882 = vmul.f32 1.0, %v881
        %v883 = vmul.f32 %v526, %v837
        %v884 = vmul.f32 %v554, %v852
        %v885 = vmul.f32 %v528, %v867
        %v886 = vmul.f32 %v556, %v882
        %v887 = vmul.f32 %v883, %v775
        %v888 = vmul.f32 %v884, %v803
        %v889 = vmul.f32 %v885, %v777
        %v890 = vmul.f32 %v886, %v805
        %v891 = vld [vmem:[#allocation2] sm:$0xff]
        %v892 = vld [vmem:[#allocation2 + $0x8] sm:$0xff]
        %v893 = vld [vmem:[#allocation2 + $0x10] sm:$0xff]
        %v894 = vld [vmem:[#allocation2 + $0x18] sm:$0xff]
        %v895 = vpack.c.bf16 %v889, %v887
        %v896 = vpack.c.bf16 %v890, %v888
        %v897 = vld [vmem:[%s252] sm:$0xff]
        %v898 = vld [vmem:[%s252 + $0x8] sm:$0xff]
        %v899 = vld [vmem:[%s252 + $0x10] sm:$0xff]
        %v900 = vld [vmem:[%s252 + $0x18] sm:$0xff]
        %v901 = vld [vmem:[%s252 + $0x20] sm:$0xff]
        %v902 = vld [vmem:[%s252 + $0x28] sm:$0xff]
        %v903 = vld [vmem:[%s252 + $0x30] sm:$0xff]
        %v904 = vld [vmem:[%s252 + $0x38] sm:$0xff]
        %v905 = vld [vmem:[%s252 + $0x40] sm:$0xff]
        %v906 = vld [vmem:[%s252 + $0x48] sm:$0xff]
        %v907 = vld [vmem:[%s252 + $0x50] sm:$0xff]
        %v908 = vld [vmem:[%s252 + $0x58] sm:$0xff]
        %v909 = vld [vmem:[%s252 + $0x60] sm:$0xff]
        %v910 = vld [vmem:[%s252 + $0x68] sm:$0xff]
        %v911 = vld [vmem:[%s252 + $0x70] sm:$0xff]
        %v912 = vld [vmem:[%s252 + $0x78] sm:$0xff]
        %v913 = vld [vmem:[%s252 + $0x80] sm:$0xff]
        %v914 = vld [vmem:[%s252 + $0x88] sm:$0xff]
        %v915 = vld [vmem:[%s252 + $0x90] sm:$0xff]
        %v916 = vld [vmem:[%s252 + $0x98] sm:$0xff]
        %v917 = vld [vmem:[%s252 + $0xa0] sm:$0xff]
        %v918 = vld [vmem:[%s252 + $0xa8] sm:$0xff]
        %v919 = vld [vmem:[%s252 + $0xb0] sm:$0xff]
        %v920 = vld [vmem:[%s252 + $0xb8] sm:$0xff]
        %v921 = vld [vmem:[%s252 + $0xc0] sm:$0xff]
        %v922 = vld [vmem:[%s252 + $0xc8] sm:$0xff]
        %v923 = vld [vmem:[%s252 + $0xd0] sm:$0xff]
        %v924 = vld [vmem:[%s252 + $0xd8] sm:$0xff]
        %v925 = vld [vmem:[%s252 + $0xe0] sm:$0xff]
        %v926 = vld [vmem:[%s252 + $0xe8] sm:$0xff]
        %v927 = vld [vmem:[%s252 + $0xf0] sm:$0xff]
        %v928 = vld [vmem:[%s252 + $0xf8] sm:$0xff]
        %v961 = vunpack.c.l.b16 %v897
        %v962 = vunpack.c.h.b16 %v897
        %v963 = vunpack.c.l.b16 %v898
        %v964 = vunpack.c.h.b16 %v898
        %v965 = vunpack.c.l.b16 %v899
        %v966 = vunpack.c.h.b16 %v899
        %v967 = vunpack.c.l.b16 %v900
        %v968 = vunpack.c.h.b16 %v900
        %v969 = vunpack.c.l.b16 %v901
        %v970 = vunpack.c.h.b16 %v901
        %v971 = vunpack.c.l.b16 %v902
        %v972 = vunpack.c.h.b16 %v902
        %v973 = vunpack.c.l.b16 %v903
        %v974 = vunpack.c.h.b16 %v903
        %v975 = vunpack.c.l.b16 %v904
        %v976 = vunpack.c.h.b16 %v904
        %v977 = vunpack.c.l.b16 %v905
        %v978 = vunpack.c.h.b16 %v905
        %v979 = vunpack.c.l.b16 %v906
        %v980 = vunpack.c.h.b16 %v906
        %v981 = vunpack.c.l.b16 %v907
        %v982 = vunpack.c.h.b16 %v907
        %v983 = vunpack.c.l.b16 %v908
        %v984 = vunpack.c.h.b16 %v908
        %v985 = vunpack.c.l.b16 %v909
        %v986 = vunpack.c.h.b16 %v909
        %v987 = vunpack.c.l.b16 %v910
        %v988 = vunpack.c.h.b16 %v910
        %v989 = vunpack.c.l.b16 %v911
        %v990 = vunpack.c.h.b16 %v911
        %v991 = vunpack.c.l.b16 %v912
        %v992 = vunpack.c.h.b16 %v912
        %v993 = vunpack.c.l.b16 %v913
        %v994 = vunpack.c.h.b16 %v913
        %v995 = vunpack.c.l.b16 %v914
        %v996 = vunpack.c.h.b16 %v914
        %v997 = vunpack.c.l.b16 %v915
        %v998 = vunpack.c.h.b16 %v915
        %v999 = vunpack.c.l.b16 %v916
        %v1000 = vunpack.c.h.b16 %v916
        %v1001 = vunpack.c.l.b16 %v917
        %v1002 = vunpack.c.h.b16 %v917
        %v1003 = vunpack.c.l.b16 %v918
        %v1004 = vunpack.c.h.b16 %v918
        %v1005 = vunpack.c.l.b16 %v919
        %v1006 = vunpack.c.h.b16 %v919
        %v1007 = vunpack.c.l.b16 %v920
        %v1008 = vunpack.c.h.b16 %v920
        %v1009 = vunpack.c.l.b16 %v921
        %v1010 = vunpack.c.h.b16 %v921
        %v1011 = vunpack.c.l.b16 %v922
        %v1012 = vunpack.c.h.b16 %v922
        %v1013 = vunpack.c.l.b16 %v923
        %v1014 = vunpack.c.h.b16 %v923
        %v1015 = vunpack.c.l.b16 %v924
        %v1016 = vunpack.c.h.b16 %v924
        %v1017 = vunpack.c.l.b16 %v925
        %v1018 = vunpack.c.h.b16 %v925
        %v1019 = vunpack.c.l.b16 %v926
        %v1020 = vunpack.c.h.b16 %v926
        %v1021 = vunpack.c.l.b16 %v927
        %v1022 = vunpack.c.h.b16 %v927
        %v1023 = vunpack.c.l.b16 %v928
        %v1024 = vunpack.c.h.b16 %v928
        %v1025 = vpack.c.b16 %v963, %v961
        %v1026 = vpack.c.b16 %v964, %v962
        %v1027 = vpack.c.b16 %v967, %v965
        %v1028 = vpack.c.b16 %v968, %v966
        %v1029 = vpack.c.b16 %v971, %v969
        %v1030 = vpack.c.b16 %v972, %v970
        %v1031 = vpack.c.b16 %v975, %v973
        %v1032 = vpack.c.b16 %v976, %v974
        %v1033 = vpack.c.b16 %v979, %v977
        %v1034 = vpack.c.b16 %v980, %v978
        %v1035 = vpack.c.b16 %v983, %v981
        %v1036 = vpack.c.b16 %v984, %v982
        %v1037 = vpack.c.b16 %v987, %v985
        %v1038 = vpack.c.b16 %v988, %v986
        %v1039 = vpack.c.b16 %v991, %v989
        %v1040 = vpack.c.b16 %v992, %v990
        %v1041 = vpack.c.b16 %v995, %v993
        %v1042 = vpack.c.b16 %v996, %v994
        %v1043 = vpack.c.b16 %v999, %v997
        %v1044 = vpack.c.b16 %v1000, %v998
        %v1045 = vpack.c.b16 %v1003, %v1001
        %v1046 = vpack.c.b16 %v1004, %v1002
        %v1047 = vpack.c.b16 %v1007, %v1005
        %v1048 = vpack.c.b16 %v1008, %v1006
        %v1049 = vpack.c.b16 %v1011, %v1009
        %v1050 = vpack.c.b16 %v1012, %v1010
        %v1051 = vpack.c.b16 %v1015, %v1013
        %v1052 = vpack.c.b16 %v1016, %v1014
        %v1053 = vpack.c.b16 %v1019, %v1017
        %v1054 = vpack.c.b16 %v1020, %v1018
        %v1055 = vpack.c.b16 %v1023, %v1021
        %v1056 = vpack.c.b16 %v1024, %v1022
        %1089 = vmatpush.bf16.msra.mxu0 %v1039
        %1090 = vmatpush.bf16.msra.mxu0 %v1037
        %1091 = vmatpush.bf16.msra.mxu0 %v1035
        %1092 = vmatpush.bf16.msra.mxu0 %v1033
        %1093 = vmatpush.bf16.msra.mxu0 %v1031
        %1094 = vmatpush.bf16.msra.mxu0 %v1029
        %1095 = vmatpush.bf16.msra.mxu0 %v1027
        %1096 = vmatpush.bf16.msra.mxu0 %v1025
        %1097 = vmatmul.bf16.gmra.mxu0 %v895
        %v1098 = vpop.f32.mrf.mxu0
        %v1099 = vadd.f32 0.0, %v1098
        %v1100 = vpop.f32.mrf.mxu0
        %v1101 = vadd.f32 0.0, %v1100
        %1102 = vdwg.mxu0
        %1103 = vmatpush.bf16.msra.mxu0 %v1055
        %1104 = vmatpush.bf16.msra.mxu0 %v1053
        %1105 = vmatpush.bf16.msra.mxu0 %v1051
        %1106 = vmatpush.bf16.msra.mxu0 %v1049
        %1107 = vmatpush.bf16.msra.mxu0 %v1047
        %1108 = vmatpush.bf16.msra.mxu0 %v1045
        %1109 = vmatpush.bf16.msra.mxu0 %v1043
        %1110 = vmatpush.bf16.msra.mxu0 %v1041
        %1111 = vmatmul.bf16.gmra.mxu0 %v896
        %v1112 = vpop.f32.mrf.mxu0
        %v1113 = vadd.f32 %v1099, %v1112
        %v1114 = vpop.f32.mrf.mxu0
        %v1115 = vadd.f32 %v1101, %v1114
        %1116 = vdwg.mxu0
        %1117 = vmatpush.bf16.msra.mxu0 %v1040
        %1118 = vmatpush.bf16.msra.mxu0 %v1038
        %1119 = vmatpush.bf16.msra.mxu0 %v1036
        %1120 = vmatpush.bf16.msra.mxu0 %v1034
        %1121 = vmatpush.bf16.msra.mxu0 %v1032
        %1122 = vmatpush.bf16.msra.mxu0 %v1030
        %1123 = vmatpush.bf16.msra.mxu0 %v1028
        %1124 = vmatpush.bf16.msra.mxu0 %v1026
        %1125 = vmatmul.bf16.gmra.mxu0 %v895
        %v1126 = vpop.f32.mrf.mxu0
        %v1127 = vadd.f32 0.0, %v1126
        %v1128 = vpop.f32.mrf.mxu0
        %v1129 = vadd.f32 0.0, %v1128
        %1130 = vdwg.mxu0
        %1131 = vmatpush.bf16.msra.mxu0 %v1056
        %1132 = vmatpush.bf16.msra.mxu0 %v1054
        %1133 = vmatpush.bf16.msra.mxu0 %v1052
        %1134 = vmatpush.bf16.msra.mxu0 %v1050
        %1135 = vmatpush.bf16.msra.mxu0 %v1048
        %1136 = vmatpush.bf16.msra.mxu0 %v1046
        %1137 = vmatpush.bf16.msra.mxu0 %v1044
        %1138 = vmatpush.bf16.msra.mxu0 %v1042
        %1139 = vmatmul.bf16.gmra.mxu0 %v896
        %v1140 = vpop.f32.mrf.mxu0
        %v1141 = vadd.f32 %v1127, %v1140
        %v1142 = vpop.f32.mrf.mxu0
        %v1143 = vadd.f32 %v1129, %v1142
        %1144 = vdwg.mxu0
        %v1145 = vadd.f32 %v891, %v1113
        %v1146 = vadd.f32 %v892, %v1141
        %v1147 = vadd.f32 %v893, %v1115
        %v1148 = vadd.f32 %v894, %v1143
        %1149 = vst [vmem:[#allocation2] sm:$0xff] %v1145
        %1150 = vst [vmem:[#allocation2 + $0x8] sm:$0xff] %v1146
        %1151 = vst [vmem:[#allocation2 + $0x10] sm:$0xff] %v1147
        %1152 = vst [vmem:[#allocation2 + $0x18] sm:$0xff] %v1148
        %p1153 = scmp.eq.s32.totalorder %s28, 2
        // Predicated region
        $region49: #{tpu_custom_call.1} parent=31 // pred_check
          %p1154 = pneg %p1153
        $region50: #{tpu_custom_call.1} parent=31 // pred_check_branch
          %1156 = sbr.rel (%p1154) target = $region52
        $region51: #{tpu_custom_call.1} parent=31 // pred_region
          %v1157 = vld [vmem:[#allocation2] sm:$0xff]
          %v1158 = vld [vmem:[#allocation2 + $0x8] sm:$0xff]
          %v1159 = vld [vmem:[#allocation2 + $0x10] sm:$0xff]
          %v1160 = vld [vmem:[#allocation2 + $0x18] sm:$0xff]
          %v1161 = vpack.c.bf16 %v1158, %v1157
          %v1162 = vpack.c.bf16 %v1160, %v1159
          %1163 = vst [vmem:[%s285] sm:$0xff] %v1161
          %1164 = vst [vmem:[%s285 + $0x8] sm:$0xff] %v1162
        $region52: #{tpu_custom_call.1} parent=31 // pred_fallthru
          _
        %s1165 = sand.u32 %s121, 1
        %s1166 = scalar_lea.sflag [#allocation5], %s1165
        %s1167 = sand.u32 %s121, 1
        %s1168 = smul.addr %s1167, 16
        %s1169 = scalar_lea.vmem [#allocation9], %s1168
        // Predicated region
        $region53: #{tpu_custom_call.1} parent=31 // pred_check
          %p1170 = pneg %p131
        $region54: #{tpu_custom_call.1} parent=31 // pred_check_branch
          %1172 = sbr.rel (%p1170) target = $region56
        $region55: #{tpu_custom_call.1} parent=31 // pred_region
          %s1173 = smul.u32 2, %s27
          %1175 = vsyncadd %s1166, 0
          %s1176 = smul.addr %s1173, 2
          %s1177 = smul.addr %s1176, 4
          %s1178 = scalar_lea.hbm %s3, %s1177
          %s1179 = sshll.u32 %s1169, 4
          %s1180 = int_to_ptr.vmem [resolvable:$true] %s1179
          %s1181 = sshll.u32 %s1178, 4
          %s1182 = int_to_ptr.hbm [resolvable:$true] %s1181
          %1187 = dma.vmem_to_hbm [thread:$0]  %s1180, 256, %s1182, %s1166, 128, 128, 8
        $region56: #{tpu_custom_call.1} parent=31 // pred_fallthru
          _
      $region32: #{tpu_custom_call.1} parent=5 // pred_fallthru
        _
      %p1188 = scmp.le.s32.totalorder 2, %s18
      // Predicated region
      $region57: #{tpu_custom_call.1} parent=5 // pred_check
        %p1189 = pneg %p1188
      $region58: #{tpu_custom_call.1} parent=5 // pred_check_branch
        %1191 = sbr.rel (%p1189) target = $region60
      $region59: #{tpu_custom_call.1} parent=5 // pred_region
        %s1192 = ssub.s32 %s18, 2
        // Predicated region
        $region61: #{tpu_custom_call.1} parent=59 // pred_check
          %p1193 = pneg %p137
        $region62: #{tpu_custom_call.1} parent=59 // pred_check_branch
          %1195 = sbr.rel (%p1193) target = $region64
        $region63: #{tpu_custom_call.1} parent=59 // pred_region
          %s1196 = sand.u32 %s122, 1
          %s1197 = scalar_lea.sflag [#allocation5], %s1196
          %s1198 = sand.u32 %s122, 1
          %s1199 = smul.addr %s1198, 16
          %s1200 = scalar_lea.vmem [#allocation9], %s1199
          %1202 = dma.done %s1197, 256
        $region64: #{tpu_custom_call.1} parent=59 // pred_fallthru
          _
      $region60: #{tpu_custom_call.1} parent=5 // pred_fallthru
        _
    $region6: #{tpu_custom_call.1} parent=1 // loop_footer
      %s22 = sadd.s32 1, %s18
    $region7: #{tpu_custom_call.1} parent=1 // loop_footer_branch
      %17 = sbr.rel target = $region3
    $region8: #{tpu_custom_call.1} parent=1 // loop_exit
      _
    %1203 = vsyncpa [#allocation4], 1
    %s1204 = scalar_lea.sflag [#allocation4], 1
    %1205 = vsyncpa %s1204, 1
    %1206 = vsyncpa [#allocation7], 1
    %s1207 = scalar_lea.sflag [#allocation7], 1
    %1208 = vsyncpa %s1207, 1
    %1209 = vsyncpa [#allocation5], 1
    %s1210 = scalar_lea.sflag [#allocation5], 1
    %1211 = vsyncpa %s1210, 1

</llo_original>
